<compile_context>
chip_gen: v6e
topology: v6e:2x2x1
jax: 0.10.0
libtpu: 0.0.40
codegen_flags: <defaults>
</compile_context>

<pallas_src>
import math
import functools

import jax
import jax.numpy as jnp
from jax import lax
from jax.experimental import pallas as pl
from jax.experimental.pallas import tpu as pltpu

F32 = jnp.float32
WEEK = 168


def _vmem():
    return pl.BlockSpec(memory_space=pltpu.MemorySpace.VMEM)


# ---------------------------------------------------------------------------
# Kernel 1: time table  T = row_normalized_gaussian(rolled_idx, sigma) @ week_emb
# ---------------------------------------------------------------------------
def _time_table_kernel(idx_ref, sigma_ref, emb_ref, o_ref):
    x = idx_ref[...]                                   # (168, 168) rolled distances
    sig = jnp.abs(sigma_ref[...])                      # (168, 1)
    var = sig * sig
    lw = lax.rsqrt(2.0 * math.pi * var) * jnp.exp(-(x * x) / (2.0 * var))
    denom = jnp.sum(lw, axis=1, keepdims=True)         # row sums (permutation-invariant)
    t = jnp.dot(lw, emb_ref[...], preferred_element_type=jnp.float32)
    o_ref[...] = t * pl.reciprocal(denom, approx=True)


def time_table(rolled_idx, sigma, week_emb):
    Hh = week_emb.shape[1]
    return pl.pallas_call(
        _time_table_kernel,
        out_shape=jax.ShapeDtypeStruct((WEEK, Hh), F32),
        in_specs=[_vmem()] * 3,
        out_specs=_vmem(),
    )(rolled_idx, sigma, week_emb)


# ---------------------------------------------------------------------------
# Kernel 2: fcpt (partial matmuls, no concat) + LayerNorm1 + GRU input projection
# ---------------------------------------------------------------------------
def _pre_rnn_kernel(xe_ref, te_ref, wx_ref, wt_ref, b_ref, g_ref, beta_ref,
                    wi_ref, bi_ref, o_ref):
    dot = lambda a, w: jnp.dot(a, w, preferred_element_type=jnp.float32)
    poi = dot(xe_ref[...], wx_ref[...]) + dot(te_ref[...], wt_ref[...]) + b_ref[...]
    mu = jnp.mean(poi, axis=-1, keepdims=True)
    xc = poi - mu
    var = jnp.mean(xc * xc, axis=-1, keepdims=True)
    ln = xc * lax.rsqrt(var + 1e-5) * g_ref[...] + beta_ref[...]
    # GRU input-side gates, hoisted out of the recurrence: one (B,H)@(H,3H) matmul.
    o_ref[...] = dot(ln, wi_ref[...]) + bi_ref[...]


def pre_rnn(x_emb, t_emb1, fcpt_w_x, fcpt_w_t, fcpt_b, ln1_g, ln1_b, wi_cat, bi_cat):
    B = x_emb.shape[0]
    H3 = wi_cat.shape[1]
    return pl.pallas_call(
        _pre_rnn_kernel,
        out_shape=jax.ShapeDtypeStruct((B, H3), F32),
        in_specs=[_vmem()] * 9,
        out_specs=_vmem(),
    )(x_emb, t_emb1, fcpt_w_x, fcpt_w_t, fcpt_b, ln1_g, ln1_b, wi_cat, bi_cat)


# ---------------------------------------------------------------------------
# Kernel 3: GRU recurrence (input projection already applied)
# Single invocation, no grid: all steps stay in VMEM, one HBM writeback of the
# full (S,U,H) output (no per-step lane-sparse HBM stores).
# Hidden-side gates kept as three (U,H)@(H,H) dots to avoid in-kernel lane
# slicing of a fused (U,3H) result (per-step cost is negligible at these sizes).
# ---------------------------------------------------------------------------
def _gru_kernel(gxr_ref, gxz_ref, gxn_ref, h0_ref, whr_ref, whz_ref, whn_ref,
                bhn_ref, out_ref):
    S = gxr_ref.shape[0]
    dot = lambda a, w: jnp.dot(a, w, preferred_element_type=jnp.float32)
    h = h0_ref[...]
    for i in range(S):                                   # static trip count, unrolled
        r = jax.nn.sigmoid(gxr_ref[i] + dot(h, whr_ref[...]))
        z = jax.nn.sigmoid(gxz_ref[i] + dot(h, whz_ref[...]))
        n = jnp.tanh(gxn_ref[i] + r * (dot(h, whn_ref[...]) + bhn_ref[...]))
        h = (1.0 - z) * n + z * h
        out_ref[i] = h


def gru_seq(gxr, gxz, gxn, h0, p):
    # TODO(synk): rnn_factory is abstract in the reference code; a single-layer
    # GRU (PyTorch nn.GRU cell semantics, merged r/z biases) is the concrete RNN.
    S, U, H = gxr.shape
    return pl.pallas_call(
        _gru_kernel,
        out_shape=jax.ShapeDtypeStruct((S, U, H), F32),
        in_specs=[_vmem()] * 8,
        out_specs=_vmem(),
    )(gxr, gxz, gxn, h0, p["w_hr"], p["w_hz"], p["w_hn"], p["b_hn"])


# ---------------------------------------------------------------------------
# Kernel 4: generic fused linear (used for the (H,3H) QKV projection)
# ---------------------------------------------------------------------------
def _linear_kernel(x_ref, w_ref, b_ref, o_ref):
    o_ref[...] = jnp.dot(x_ref[...], w_ref[...],
                         preferred_element_type=jnp.float32) + b_ref[...]


def linear(x, w, b):
    M = x.shape[0]
    N = w.shape[1]
    return pl.pallas_call(
        _linear_kernel,
        out_shape=jax.ShapeDtypeStruct((M, N), F32),
        in_specs=[_vmem()] * 3,
        out_specs=_vmem(),
    )(x, w, b)


# ---------------------------------------------------------------------------
# Kernel 5: MultiHeadAttention core.  The reference attends heads-vs-heads per
# (seq, user) token (scores are (nh, nh) per token) -> batched over B tokens.
# ---------------------------------------------------------------------------
def _mha_core_kernel(q_ref, k_ref, v_ref, o_ref, *, scale):
    q = q_ref[...]
    k = k_ref[...]
    v = v_ref[...]
    scores = lax.dot_general(q, k, (((2,), (2,)), ((0,), (0,))),
                             preferred_element_type=jnp.float32) * scale
    m = jnp.max(scores, axis=-1, keepdims=True)
    e = jnp.exp(scores - m)
    attn = e * pl.reciprocal(jnp.sum(e, axis=-1, keepdims=True), approx=True)
    o_ref[...] = lax.dot_general(attn, v, (((2,), (1,)), ((0,), (0,))),
                                 preferred_element_type=jnp.float32)


def mha_core(q, k, v, scale):
    return pl.pallas_call(
        functools.partial(_mha_core_kernel, scale=scale),
        out_shape=jax.ShapeDtypeStruct(q.shape, F32),
        in_specs=[_vmem()] * 3,
        out_specs=_vmem(),
    )(q, k, v)


# ---------------------------------------------------------------------------
# Kernel 6: MHA out-projection + causal AttentionModule pooling + LayerNorm2 +
# final fc.  The python `for i in range(seq_len)` of the reference is flattened
# to one (B,B) masked softmax (mask: same user AND key_step <= query_step) and
# one (B,B)@(B,H) MXU matmul -- no transposes.  The final fc over
# concat([out_w, p_u, t_emb2]) is expressed as three partial matmuls.
# ---------------------------------------------------------------------------
def _tail_kernel(attn_ref, wp_ref, bp_ref, w1a_ref, w1b_ref, b1_ref, w2_ref,
                 b2_ref, bias_ref, g2_ref, beta2_ref, pu_ref, te2_ref,
                 fca_ref, fcu_ref, fct_ref, fcb_ref, y_ref):
    dot = lambda a, w: jnp.dot(a, w, preferred_element_type=jnp.float32)
    out_mha = dot(attn_ref[...], wp_ref[...]) + bp_ref[...]              # (B, H)
    # AttentionModule: Linear(2H,H) split into the hidden-state (j) half w1a
    # (carries the bias) and the current-state (i) half w1b.
    a = dot(out_mha, w1a_ref[...]) + b1_ref[...]                         # (B, H)  key side
    b = dot(out_mha, w1b_ref[...])                                       # (B, H)  query side
    pre = a[None, :, :] + b[:, None, :]                                  # (B, B, H)
    scores = jnp.sum(jnp.tanh(pre) * w2_ref[...][None], axis=-1)         # (B, B)
    scores = scores + b2_ref[...] + bias_ref[...]                        # causal + same-user mask
    m = jnp.max(scores, axis=-1, keepdims=True)
    e = jnp.exp(scores - m)
    w = e * pl.reciprocal(jnp.sum(e, axis=-1, keepdims=True), approx=True)
    pooled = dot(w, out_mha)                                             # (B, H)
    # LayerNorm2
    mu = jnp.mean(pooled, axis=-1, keepdims=True)
    xc = pooled - mu
    var = jnp.mean(xc * xc, axis=-1, keepdims=True)
    ow = xc * lax.rsqrt(var + 1e-5) * g2_ref[...] + beta2_ref[...]
    # final fc: concat([ow, p_u, t_emb2]) @ fc_w  ==  three partial matmuls
    y_ref[...] = (dot(ow, fca_ref[...]) + dot(pu_ref[...], fcu_ref[...])
                  + dot(te2_ref[...], fct_ref[...]) + fcb_ref[...])


def tail(attn_flat, wp, bp, w1a, w1b, b1, w2, b2, mask_bias, ln2_g, ln2_b,
         p_u_b, t_emb2, fc_w_a, fc_w_u, fc_w_t, fc_b):
    B = attn_flat.shape[0]
    N = fc_w_a.shape[1]
    return pl.pallas_call(
        _tail_kernel,
        out_shape=jax.ShapeDtypeStruct((B, N), F32),
        in_specs=[_vmem()] * 17,
        out_specs=_vmem(),
    )(attn_flat, wp, bp, w1a, w1b, b1, w2, b2, mask_bias, ln2_g, ln2_b,
      p_u_b, t_emb2, fc_w_a, fc_w_u, fc_w_t, fc_b)


# ---------------------------------------------------------------------------
# Parameters (deterministic synthetic init) and forward glue
# ---------------------------------------------------------------------------
def init_params(key, input_size, user_count, H):
    Hh = H // 2
    keys = jax.random.split(key, 32)
    it = iter(keys)
    n = lambda shape, scale=0.1: jax.random.normal(next(it), shape, F32) * scale
    params = {
        "encoder_emb": n((input_size, H)),
        "user_emb": n((user_count, H)),
        "week_emb": n((WEEK, Hh)),
        "sigma": jnp.ones((WEEK, 1), F32),
        "fcpt_w": n((2 * H - Hh, H)), "fcpt_b": n((1, H)),
        "fc_w": n((3 * H - Hh, input_size)), "fc_b": n((1, input_size)),
        "ln1_g": jnp.ones((1, H), F32), "ln1_b": jnp.zeros((1, H), F32),
        "ln2_g": jnp.ones((1, H), F32), "ln2_b": jnp.zeros((1, H), F32),
        # GRU weights stored pre-transposed (activations multiply on the left)
        "gru": {name: n((H, H)) for name in
                ["w_ir", "w_iz", "w_in", "w_hr", "w_hz", "w_hn"]},
        # MultiHeadAttention
        "wq": n((H, H)), "bq": n((1, H)),
        "wk": n((H, H)), "bk": n((1, H)),
        "wv": n((H, H)), "bv": n((1, H)),
        "wp": n((H, H)), "bp": n((1, H)),
        # AttentionModule (Linear(2H,H) split into the two H-wide halves)
        "w1a": n((H, H)), "w1b": n((H, H)), "b1": n((1, H)),
        "w2": n((1, H)), "b2": n((1, 1)),
    }
    params["gru"].update({"b_r": n((1, H)), "b_z": n((1, H)),
                          "b_in": n((1, H)), "b_hn": n((1, H))})
    # Constant buffer:  week_matrix[i, j] = (i + j) % 168, so the per-slot time
    # embedding is a row of  T = row_normalized_gaussian(rolled_idx) @ week_emb
    # with rolled_idx[i, k] = week_weight_index[i, (k - i) % 168].
    ar = jnp.arange(WEEK)
    jmat = (ar[None, :] - ar[:, None]) % WEEK
    d = jnp.abs(ar[:, None] - jmat).astype(F32)
    params["rolled_week_weight_index"] = jnp.minimum(d, WEEK - d)
    return params


def replay_forward(params, x, t, t_slot, s, y_t, y_t_slot, y_s, h, active_user,
                   hidden_size, num_heads=8):
    S, U = x.shape
    H = hidden_size
    Hh = H // 2
    hd = H // num_heads
    B = S * U
    g = params["gru"]

    # --- (1) time table (Pallas) + tiny per-token row gathers (glue) --------
    ttab = time_table(params["rolled_week_weight_index"], params["sigma"],
                      params["week_emb"])                      # (168, Hh)
    t_emb1 = ttab[t_slot.reshape(-1)]                          # (B, Hh)  glue gather
    t_emb2 = ttab[y_t_slot.reshape(-1)]                        # (B, Hh)  glue gather
    x_emb = params["encoder_emb"][x.reshape(-1)]               # (B, H)   glue gather

    # --- (2) fcpt + LayerNorm1 + GRU input projection (fused, Pallas) -------
    wi_cat = jnp.concatenate([g["w_ir"], g["w_iz"], g["w_in"]], axis=1)   # (H, 3H)
    bi_cat = jnp.concatenate([g["b_r"], g["b_z"], g["b_in"]], axis=1)     # (1, 3H)
    gates = pre_rnn(x_emb, t_emb1,
                    params["fcpt_w"][:H], params["fcpt_w"][H:], params["fcpt_b"],
                    params["ln1_g"], params["ln1_b"], wi_cat, bi_cat)     # (B, 3H)

    # --- (3) GRU recurrence (Pallas, input projection hoisted) --------------
    gxr = gates[:, :H].reshape(S, U, H)
    gxz = gates[:, H:2 * H].reshape(S, U, H)
    gxn = gates[:, 2 * H:].reshape(S, U, H)
    rnn_out = gru_seq(gxr, gxz, gxn, h.reshape(U, H), g)       # (S, U, H)
    h_new = rnn_out[-1]                                        # last step == final state
    out_flat = rnn_out.reshape(B, H)

    # --- (4) fused QKV projection (Pallas) -----------------------------------
    wqkv = jnp.concatenate([params["wq"], params["wk"], params["wv"]], axis=1)
    bqkv = jnp.concatenate([params["bq"], params["bk"], params["bv"]], axis=1)
    qkv = linear(out_flat, wqkv, bqkv)                         # (B, 3H)
    q = qkv[:, :H].reshape(B, num_heads, hd)
    k = qkv[:, H:2 * H].reshape(B, num_heads, hd)
    v = qkv[:, 2 * H:].reshape(B, num_heads, hd)

    # --- (5) MHA core (Pallas) ------------------------------------------------
    attn_flat = mha_core(q, k, v, 1.0 / math.sqrt(hd)).reshape(B, H)

    # --- (6) proj + causal pooling + LayerNorm2 + final fc (fused, Pallas) ---
    p_u = params["user_emb"][active_user.reshape(-1)]          # (U, H)  glue gather
    p_u_b = jnp.broadcast_to(p_u[None], (S, U, H)).reshape(B, H)
    bi = jnp.arange(B)
    s_i = bi // U
    u_i = bi % U
    valid = (u_i[:, None] == u_i[None, :]) & (s_i[None, :] <= s_i[:, None])
    mask_bias = jnp.where(valid, 0.0, -1e30).astype(F32)       # (B, B) static mask
    y = tail(attn_flat, params["wp"], params["bp"], params["w1a"], params["w1b"],
             params["b1"], params["w2"], params["b2"], mask_bias,
             params["ln2_g"], params["ln2_b"], p_u_b, t_emb2,
             params["fc_w"][:H], params["fc_w"][H:2 * H], params["fc_w"][2 * H:],
             params["fc_b"])                                   # (B, input_size)
    return y.reshape(S, U, -1), h_new.reshape(1, U, H)


if __name__ == "__main__":
    INPUT_SIZE, USER_COUNT, HIDDEN = 64, 10, 32
    S, U = 8, 4

    key = jax.random.PRNGKey(0)
    pkey, k1, k2, k3, k4, k5 = jax.random.split(key, 6)
    params = init_params(pkey, INPUT_SIZE, USER_COUNT, HIDDEN)

    x = jax.random.randint(k1, (S, U), 0, INPUT_SIZE, dtype=jnp.int32)
    t_slot = jax.random.randint(k2, (S, U), 0, WEEK, dtype=jnp.int32)
    y_t_slot = jax.random.randint(k3, (S, U), 0, WEEK, dtype=jnp.int32)
    t = jnp.zeros((S, U), F32)        # unused by forward (kept for signature parity)
    s = jnp.zeros((S, U, 2), F32)     # unused by forward
    y_t = jnp.zeros((S, U), F32)      # unused by forward
    y_s = jnp.zeros((S, U, 2), F32)   # unused by forward
    h = jax.random.normal(k4, (1, U, HIDDEN), F32) * 0.1
    active_user = jax.random.randint(k5, (U,), 0, USER_COUNT, dtype=jnp.int32)

    y_linear, h_new = replay_forward(params, x, t, t_slot, s, y_t, y_t_slot,
                                     y_s, h, active_user, HIDDEN)
    jax.block_until_ready((y_linear, h_new))
    assert y_linear.shape == (S, U, INPUT_SIZE)
    assert h_new.shape == (1, U, HIDDEN)
    print("KERNEL_OK")
</pallas_src>

<mosaic_0001>
module attributes {stable_mosaic.version = 11 : i64} {
  func.func @_time_table_kernel(%arg0: memref<168x168xf32, #tpu.memory_space<vmem>>, %arg1: memref<168x1xf32, #tpu.memory_space<vmem>>, %arg2: memref<168x16xf32, #tpu.memory_space<vmem>>, %arg3: memref<168x16xf32, #tpu.memory_space<vmem>>) attributes {dimension_semantics = [], scalar_prefetch = 0 : i64, scratch_operands = 0 : i64, tpu.core_type = #tpu.core_type<tc>} {
    %c0 = arith.constant 0 : index
    %c0_0 = arith.constant 0 : index
    %0 = vector.load %arg0[%c0, %c0_0] : memref<168x168xf32, #tpu.memory_space<vmem>>, vector<168x168xf32>
    %c0_1 = arith.constant 0 : index
    %c0_2 = arith.constant 0 : index
    %1 = vector.load %arg1[%c0_1, %c0_2] : memref<168x1xf32, #tpu.memory_space<vmem>>, vector<168x1xf32>
    %2 = math.absf %1 : vector<168x1xf32>
    %3 = arith.mulf %2, %2 : vector<168x1xf32>
    %cst = arith.constant 6.28318548 : f32
    %4 = vector.broadcast %cst : f32 to vector<168x1xf32>
    %5 = arith.mulf %4, %3 : vector<168x1xf32>
    %6 = math.rsqrt %5 : vector<168x1xf32>
    %7 = arith.mulf %0, %0 : vector<168x168xf32>
    %cst_3 = arith.constant 0.000000e+00 : f32
    %8 = vector.broadcast %cst_3 : f32 to vector<168x168xf32>
    %9 = arith.subf %8, %7 : vector<168x168xf32>
    %cst_4 = arith.constant 2.000000e+00 : f32
    %10 = vector.broadcast %cst_4 : f32 to vector<168x1xf32>
    %11 = arith.mulf %10, %3 : vector<168x1xf32>
    %12 = vector.broadcast %11 : vector<168x1xf32> to vector<168x168xf32>
    %13 = arith.divf %9, %12 : vector<168x168xf32>
    %14 = math.exp %13 : vector<168x168xf32>
    %15 = vector.broadcast %6 : vector<168x1xf32> to vector<168x168xf32>
    %16 = arith.mulf %15, %14 : vector<168x168xf32>
    %cst_5 = arith.constant dense<0.000000e+00> : vector<168xf32>
    %17 = vector.multi_reduction <add>, %16, %cst_5 [1] : vector<168x168xf32> to vector<168xf32>
    %18 = vector.shape_cast %17 : vector<168xf32> to vector<168x1xf32>
    %c0_6 = arith.constant 0 : index
    %c0_7 = arith.constant 0 : index
    %19 = vector.load %arg2[%c0_6, %c0_7] : memref<168x16xf32, #tpu.memory_space<vmem>>, vector<168x16xf32>
    %cst_8 = arith.constant dense<0.000000e+00> : vector<168x16xf32>
    %20 = tpu.matmul %16, %19, %cst_8 {dimension_numbers = #tpu.dot_dimension_numbers<[1], [0], [0], [1], [0, 0, 1, 1], [], []>} : vector<168x168xf32>, vector<168x16xf32>, vector<168x16xf32> -> vector<168x16xf32>
    %21 = tpu.reciprocal %18 {approx = true} : vector<168x1xf32> -> vector<168x1xf32>
    %22 = vector.broadcast %21 : vector<168x1xf32> to vector<168x16xf32>
    %23 = arith.mulf %20, %22 : vector<168x16xf32>
    %c0_9 = arith.constant 0 : index
    %c0_10 = arith.constant 0 : index
    %24 = vector.load %arg3[%c0_9, %c0_10] : memref<168x16xf32, #tpu.memory_space<vmem>>, vector<168x16xf32>
    tpu.vector_store %arg3[%c0_9, %c0_10], %23 {strides = array<i32>} : memref<168x16xf32, #tpu.memory_space<vmem>>, vector<168x16xf32>,
    return
  }
}

</mosaic_0001>

<llo_original>
// kernel: tpu_custom_call.1
$region0: #{tpu_custom_call.1}
  #allocation0 [shape = 'u32[]', space=smem, size = 0x4, offset = 0x4, fixed_abs, tag = 'smem constant byte address 0x4 - core index']
  #allocation1 [shape = 'u32[144,128]{1,0:T(1,128)}', space=vmem, size = 0x12000, scoped, tag = 'internal scratch']
  %s0 = inlined_call_operand.vmem [shape: f32[168,168], index: 0, kind: input, shape index: {}]
  %s1 = inlined_call_operand.vmem [shape: f32[168,1], index: 1, kind: input, shape index: {}]
  %s2 = inlined_call_operand.vmem [shape: f32[168,16], index: 2, kind: input, shape index: {}]
  %s3 = inlined_call_operand.vmem [shape: f32[168,16], index: 3, kind: output, shape index: {}]
  %s4 = sld [smem:[#allocation0]]
  $region22: #{tpu_custom_call.1} parent=0
    _
  %s6 = ssub.s32 1, %s4
  %s7 = scalar_select 0, %s6, %s4
  // Predicated region
  $region2: #{tpu_custom_call.1} parent=0 // pred_check
    _
  $region3: #{tpu_custom_call.1} parent=0 // pred_check_branch
    %9 = sbr.rel (0) target = $region5
  $region4: #{tpu_custom_call.1} parent=0 // pred_region
    _
  $region5: #{tpu_custom_call.1} parent=0 // pred_fallthru
    _
  // Predicated region
  $region6: #{tpu_custom_call.1} parent=0 // pred_check
    _
  $region7: #{tpu_custom_call.1} parent=0 // pred_check_branch
    %11 = sbr.rel (0) target = $region9
  $region8: #{tpu_custom_call.1} parent=0 // pred_region
    _
  $region9: #{tpu_custom_call.1} parent=0 // pred_fallthru
    _
  // Predicated region
  $region10: #{tpu_custom_call.1} parent=0 // pred_check
    _
  $region11: #{tpu_custom_call.1} parent=0 // pred_check_branch
    %13 = sbr.rel (0) target = $region13
  $region12: #{tpu_custom_call.1} parent=0 // pred_region
    _
  $region13: #{tpu_custom_call.1} parent=0 // pred_fallthru
    _
  %v14 = vld [vmem:[%s0] sm:$0xff]
  %v15 = vld [vmem:[%s0 + $0x8] sm:$0xff]
  %v16 = vld [vmem:[%s0 + $0x10] sm:$0xff]
  %v17 = vld [vmem:[%s0 + $0x18] sm:$0xff]
  %v18 = vld [vmem:[%s0 + $0x20] sm:$0xff]
  %v19 = vld [vmem:[%s0 + $0x28] sm:$0xff]
  %v20 = vld [vmem:[%s0 + $0x30] sm:$0xff]
  %v21 = vld [vmem:[%s0 + $0x38] sm:$0xff]
  %v22 = vld [vmem:[%s0 + $0x40] sm:$0xff]
  %v23 = vld [vmem:[%s0 + $0x48] sm:$0xff]
  %v24 = vld [vmem:[%s0 + $0x50] sm:$0xff]
  %v25 = vld [vmem:[%s0 + $0x58] sm:$0xff]
  %v26 = vld [vmem:[%s0 + $0x60] sm:$0xff]
  %v27 = vld [vmem:[%s0 + $0x68] sm:$0xff]
  %v28 = vld [vmem:[%s0 + $0x70] sm:$0xff]
  %v29 = vld [vmem:[%s0 + $0x78] sm:$0xff]
  %v30 = vld [vmem:[%s0 + $0x80] sm:$0xff]
  %v31 = vld [vmem:[%s0 + $0x88] sm:$0xff]
  %v32 = vld [vmem:[%s0 + $0x90] sm:$0xff]
  %v33 = vld [vmem:[%s0 + $0x98] sm:$0xff]
  %v34 = vld [vmem:[%s0 + $0xa0] sm:$0xff]
  %v35 = vld [vmem:[%s0 + $0xa8] sm:$0xff]
  %v36 = vld [vmem:[%s0 + $0xb0] sm:$0xff]
  %v37 = vld [vmem:[%s0 + $0xb8] sm:$0xff]
  %v38 = vld [vmem:[%s0 + $0xc0] sm:$0xff]
  %v39 = vld [vmem:[%s0 + $0xc8] sm:$0xff]
  %v40 = vld [vmem:[%s0 + $0xd0] sm:$0xff]
  %v41 = vld [vmem:[%s0 + $0xd8] sm:$0xff]
  %v42 = vld [vmem:[%s0 + $0xe0] sm:$0xff]
  %v43 = vld [vmem:[%s0 + $0xe8] sm:$0xff]
  %v44 = vld [vmem:[%s0 + $0xf0] sm:$0xff]
  %v45 = vld [vmem:[%s0 + $0xf8] sm:$0xff]
  %v46 = vld [vmem:[%s0 + $0x100] sm:$0xff]
  %v47 = vld [vmem:[%s0 + $0x108] sm:$0xff]
  %v48 = vld [vmem:[%s0 + $0x110] sm:$0xff]
  %v49 = vld [vmem:[%s0 + $0x118] sm:$0xff]
  %v50 = vld [vmem:[%s0 + $0x120] sm:$0xff]
  %v51 = vld [vmem:[%s0 + $0x128] sm:$0xff]
  %v52 = vld [vmem:[%s0 + $0x130] sm:$0xff]
  %v53 = vld [vmem:[%s0 + $0x138] sm:$0xff]
  %v54 = vld [vmem:[%s0 + $0x140] sm:$0xff]
  %v55 = vld [vmem:[%s0 + $0x148] sm:$0xff]
  %v56 = vld [vmem:[%s1] sm:$0xff]
  %v57 = vld [vmem:[%s1 + $0x8] sm:$0xff]
  %v58 = vld [vmem:[%s1 + $0x10] sm:$0xff]
  %v59 = vld [vmem:[%s1 + $0x18] sm:$0xff]
  %v60 = vld [vmem:[%s1 + $0x20] sm:$0xff]
  %v61 = vld [vmem:[%s1 + $0x28] sm:$0xff]
  %v62 = vld [vmem:[%s1 + $0x30] sm:$0xff]
  %v63 = vld [vmem:[%s1 + $0x38] sm:$0xff]
  %v64 = vld [vmem:[%s1 + $0x40] sm:$0xff]
  %v65 = vld [vmem:[%s1 + $0x48] sm:$0xff]
  %v66 = vld [vmem:[%s1 + $0x50] sm:$0xff]
  %v67 = vld [vmem:[%s1 + $0x58] sm:$0xff]
  %v68 = vld [vmem:[%s1 + $0x60] sm:$0xff]
  %v69 = vld [vmem:[%s1 + $0x68] sm:$0xff]
  %v70 = vld [vmem:[%s1 + $0x70] sm:$0xff]
  %v71 = vld [vmem:[%s1 + $0x78] sm:$0xff]
  %v72 = vld [vmem:[%s1 + $0x80] sm:$0xff]
  %v73 = vld [vmem:[%s1 + $0x88] sm:$0xff]
  %v74 = vld [vmem:[%s1 + $0x90] sm:$0xff]
  %v75 = vld [vmem:[%s1 + $0x98] sm:$0xff]
  %v76 = vld [vmem:[%s1 + $0xa0] sm:$0xff]
  %v77 = vand.u32 2147483647, %v56
  %v78 = vand.u32 2147483647, %v57
  %v79 = vand.u32 2147483647, %v58
  %v80 = vand.u32 2147483647, %v59
  %v81 = vand.u32 2147483647, %v60
  %v82 = vand.u32 2147483647, %v61
  %v83 = vand.u32 2147483647, %v62
  %v84 = vand.u32 2147483647, %v63
  %v85 = vand.u32 2147483647, %v64
  %v86 = vand.u32 2147483647, %v65
  %v87 = vand.u32 2147483647, %v66
  %v88 = vand.u32 2147483647, %v67
  %v89 = vand.u32 2147483647, %v68
  %v90 = vand.u32 2147483647, %v69
  %v91 = vand.u32 2147483647, %v70
  %v92 = vand.u32 2147483647, %v71
  %v93 = vand.u32 2147483647, %v72
  %v94 = vand.u32 2147483647, %v73
  %v95 = vand.u32 2147483647, %v74
  %v96 = vand.u32 2147483647, %v75
  %v97 = vand.u32 2147483647, %v76
  %v98 = vmul.f32 %v77, %v77
  %v99 = vmul.f32 %v78, %v78
  %v100 = vmul.f32 %v79, %v79
  %v101 = vmul.f32 %v80, %v80
  %v102 = vmul.f32 %v81, %v81
  %v103 = vmul.f32 %v82, %v82
  %v104 = vmul.f32 %v83, %v83
  %v105 = vmul.f32 %v84, %v84
  %v106 = vmul.f32 %v85, %v85
  %v107 = vmul.f32 %v86, %v86
  %v108 = vmul.f32 %v87, %v87
  %v109 = vmul.f32 %v88, %v88
  %v110 = vmul.f32 %v89, %v89
  %v111 = vmul.f32 %v90, %v90
  %v112 = vmul.f32 %v91, %v91
  %v113 = vmul.f32 %v92, %v92
  %v114 = vmul.f32 %v93, %v93
  %v115 = vmul.f32 %v94, %v94
  %v116 = vmul.f32 %v95, %v95
  %v117 = vmul.f32 %v96, %v96
  %v118 = vmul.f32 %v97, %v97
  %v119 = vmul.f32 %v98, 6.2831855
  %v120 = vmul.f32 %v99, 6.2831855
  %v121 = vmul.f32 %v100, 6.2831855
  %v122 = vmul.f32 %v101, 6.2831855
  %v123 = vmul.f32 %v102, 6.2831855
  %v124 = vmul.f32 %v103, 6.2831855
  %v125 = vmul.f32 %v104, 6.2831855
  %v126 = vmul.f32 %v105, 6.2831855
  %v127 = vmul.f32 %v106, 6.2831855
  %v128 = vmul.f32 %v107, 6.2831855
  %v129 = vmul.f32 %v108, 6.2831855
  %v130 = vmul.f32 %v109, 6.2831855
  %v131 = vmul.f32 %v110, 6.2831855
  %v132 = vmul.f32 %v111, 6.2831855
  %v133 = vmul.f32 %v112, 6.2831855
  %v134 = vmul.f32 %v113, 6.2831855
  %v135 = vmul.f32 %v114, 6.2831855
  %v136 = vmul.f32 %v115, 6.2831855
  %v137 = vmul.f32 %v116, 6.2831855
  %v138 = vmul.f32 %v117, 6.2831855
  %v139 = vmul.f32 %v118, 6.2831855
  %v140 = vrsqrt.pop %v119
  %v141 = vrsqrt.pop %v120
  %v142 = vrsqrt.pop %v121
  %v143 = vrsqrt.pop %v122
  %v144 = vrsqrt.pop %v123
  %v145 = vrsqrt.pop %v124
  %v146 = vrsqrt.pop %v125
  %v147 = vrsqrt.pop %v126
  %v148 = vrsqrt.pop %v127
  %v149 = vrsqrt.pop %v128
  %v150 = vrsqrt.pop %v129
  %v151 = vrsqrt.pop %v130
  %v152 = vrsqrt.pop %v131
  %v153 = vrsqrt.pop %v132
  %v154 = vrsqrt.pop %v133
  %v155 = vrsqrt.pop %v134
  %v156 = vrsqrt.pop %v135
  %v157 = vrsqrt.pop %v136
  %v158 = vrsqrt.pop %v137
  %v159 = vrsqrt.pop %v138
  %v160 = vrsqrt.pop %v139
  %v161 = vmul.f32 %v14, %v14
  %v162 = vmul.f32 %v15, %v15
  %v163 = vmul.f32 %v16, %v16
  %v164 = vmul.f32 %v17, %v17
  %v165 = vmul.f32 %v18, %v18
  %v166 = vmul.f32 %v19, %v19
  %v167 = vmul.f32 %v20, %v20
  %v168 = vmul.f32 %v21, %v21
  %v169 = vmul.f32 %v22, %v22
  %v170 = vmul.f32 %v23, %v23
  %v171 = vmul.f32 %v24, %v24
  %v172 = vmul.f32 %v25, %v25
  %v173 = vmul.f32 %v26, %v26
  %v174 = vmul.f32 %v27, %v27
  %v175 = vmul.f32 %v28, %v28
  %v176 = vmul.f32 %v29, %v29
  %v177 = vmul.f32 %v30, %v30
  %v178 = vmul.f32 %v31, %v31
  %v179 = vmul.f32 %v32, %v32
  %v180 = vmul.f32 %v33, %v33
  %v181 = vmul.f32 %v34, %v34
  %v182 = vmul.f32 %v35, %v35
  %v183 = vmul.f32 %v36, %v36
  %v184 = vmul.f32 %v37, %v37
  %v185 = vmul.f32 %v38, %v38
  %v186 = vmul.f32 %v39, %v39
  %v187 = vmul.f32 %v40, %v40
  %v188 = vmul.f32 %v41, %v41
  %v189 = vmul.f32 %v42, %v42
  %v190 = vmul.f32 %v43, %v43
  %v191 = vmul.f32 %v44, %v44
  %v192 = vmul.f32 %v45, %v45
  %v193 = vmul.f32 %v46, %v46
  %v194 = vmul.f32 %v47, %v47
  %v195 = vmul.f32 %v48, %v48
  %v196 = vmul.f32 %v49, %v49
  %v197 = vmul.f32 %v50, %v50
  %v198 = vmul.f32 %v51, %v51
  %v199 = vmul.f32 %v52, %v52
  %v200 = vmul.f32 %v53, %v53
  %v201 = vmul.f32 %v54, %v54
  %v202 = vmul.f32 %v55, %v55
  %v203 = vsub.f32 0.0, %v161
  %v204 = vsub.f32 0.0, %v162
  %v205 = vsub.f32 0.0, %v163
  %v206 = vsub.f32 0.0, %v164
  %v207 = vsub.f32 0.0, %v165
  %v208 = vsub.f32 0.0, %v166
  %v209 = vsub.f32 0.0, %v167
  %v210 = vsub.f32 0.0, %v168
  %v211 = vsub.f32 0.0, %v169
  %v212 = vsub.f32 0.0, %v170
  %v213 = vsub.f32 0.0, %v171
  %v214 = vsub.f32 0.0, %v172
  %v215 = vsub.f32 0.0, %v173
  %v216 = vsub.f32 0.0, %v174
  %v217 = vsub.f32 0.0, %v175
  %v218 = vsub.f32 0.0, %v176
  %v219 = vsub.f32 0.0, %v177
  %v220 = vsub.f32 0.0, %v178
  %v221 = vsub.f32 0.0, %v179
  %v222 = vsub.f32 0.0, %v180
  %v223 = vsub.f32 0.0, %v181
  %v224 = vsub.f32 0.0, %v182
  %v225 = vsub.f32 0.0, %v183
  %v226 = vsub.f32 0.0, %v184
  %v227 = vsub.f32 0.0, %v185
  %v228 = vsub.f32 0.0, %v186
  %v229 = vsub.f32 0.0, %v187
  %v230 = vsub.f32 0.0, %v188
  %v231 = vsub.f32 0.0, %v189
  %v232 = vsub.f32 0.0, %v190
  %v233 = vsub.f32 0.0, %v191
  %v234 = vsub.f32 0.0, %v192
  %v235 = vsub.f32 0.0, %v193
  %v236 = vsub.f32 0.0, %v194
  %v237 = vsub.f32 0.0, %v195
  %v238 = vsub.f32 0.0, %v196
  %v239 = vsub.f32 0.0, %v197
  %v240 = vsub.f32 0.0, %v198
  %v241 = vsub.f32 0.0, %v199
  %v242 = vsub.f32 0.0, %v200
  %v243 = vsub.f32 0.0, %v201
  %v244 = vsub.f32 0.0, %v202
  %v245 = vmul.f32 %v98, 2.0
  %v246 = vmul.f32 %v99, 2.0
  %v247 = vmul.f32 %v100, 2.0
  %v248 = vmul.f32 %v101, 2.0
  %v249 = vmul.f32 %v102, 2.0
  %v250 = vmul.f32 %v103, 2.0
  %v251 = vmul.f32 %v104, 2.0
  %v252 = vmul.f32 %v105, 2.0
  %v253 = vmul.f32 %v106, 2.0
  %v254 = vmul.f32 %v107, 2.0
  %v255 = vmul.f32 %v108, 2.0
  %v256 = vmul.f32 %v109, 2.0
  %v257 = vmul.f32 %v110, 2.0
  %v258 = vmul.f32 %v111, 2.0
  %v259 = vmul.f32 %v112, 2.0
  %v260 = vmul.f32 %v113, 2.0
  %v261 = vmul.f32 %v114, 2.0
  %v262 = vmul.f32 %v115, 2.0
  %v263 = vmul.f32 %v116, 2.0
  %v264 = vmul.f32 %v117, 2.0
  %v265 = vmul.f32 %v118, 2.0
  %267 = vset.pattern.permute.xlu0 0
  %268 = vperm.xlu0 %267, %v245
  %v269 = vpop.permute.xlu0 %268
  %272 = vset.pattern.permute.xlu0 0
  %273 = vperm.xlu0 %272, %v246
  %v274 = vpop.permute.xlu0 %273
  %277 = vset.pattern.permute.xlu0 0
  %278 = vperm.xlu0 %277, %v247
  %v279 = vpop.permute.xlu0 %278
  %282 = vset.pattern.permute.xlu0 0
  %283 = vperm.xlu0 %282, %v248
  %v284 = vpop.permute.xlu0 %283
  %287 = vset.pattern.permute.xlu0 0
  %288 = vperm.xlu0 %287, %v249
  %v289 = vpop.permute.xlu0 %288
  %292 = vset.pattern.permute.xlu0 0
  %293 = vperm.xlu0 %292, %v250
  %v294 = vpop.permute.xlu0 %293
  %297 = vset.pattern.permute.xlu0 0
  %298 = vperm.xlu0 %297, %v251
  %v299 = vpop.permute.xlu0 %298
  %302 = vset.pattern.permute.xlu0 0
  %303 = vperm.xlu0 %302, %v252
  %v304 = vpop.permute.xlu0 %303
  %307 = vset.pattern.permute.xlu0 0
  %308 = vperm.xlu0 %307, %v253
  %v309 = vpop.permute.xlu0 %308
  %312 = vset.pattern.permute.xlu0 0
  %313 = vperm.xlu0 %312, %v254
  %v314 = vpop.permute.xlu0 %313
  %317 = vset.pattern.permute.xlu0 0
  %318 = vperm.xlu0 %317, %v255
  %v319 = vpop.permute.xlu0 %318
  %322 = vset.pattern.permute.xlu0 0
  %323 = vperm.xlu0 %322, %v256
  %v324 = vpop.permute.xlu0 %323
  %327 = vset.pattern.permute.xlu0 0
  %328 = vperm.xlu0 %327, %v257
  %v329 = vpop.permute.xlu0 %328
  %332 = vset.pattern.permute.xlu0 0
  %333 = vperm.xlu0 %332, %v258
  %v334 = vpop.permute.xlu0 %333
  %337 = vset.pattern.permute.xlu0 0
  %338 = vperm.xlu0 %337, %v259
  %v339 = vpop.permute.xlu0 %338
  %342 = vset.pattern.permute.xlu0 0
  %343 = vperm.xlu0 %342, %v260
  %v344 = vpop.permute.xlu0 %343
  %347 = vset.pattern.permute.xlu0 0
  %348 = vperm.xlu0 %347, %v261
  %v349 = vpop.permute.xlu0 %348
  %352 = vset.pattern.permute.xlu0 0
  %353 = vperm.xlu0 %352, %v262
  %v354 = vpop.permute.xlu0 %353
  %357 = vset.pattern.permute.xlu0 0
  %358 = vperm.xlu0 %357, %v263
  %v359 = vpop.permute.xlu0 %358
  %362 = vset.pattern.permute.xlu0 0
  %363 = vperm.xlu0 %362, %v264
  %v364 = vpop.permute.xlu0 %363
  %367 = vset.pattern.permute.xlu0 0
  %368 = vperm.xlu0 %367, %v265
  %v369 = vpop.permute.xlu0 %368
  %v371 = vrcp.pop %v269
  %v372 = vmul.f32 %v203, %v371
  %v373 = vmul.f32 %v204, %v371
  %v374 = vrcp.pop %v274
  %v375 = vmul.f32 %v205, %v374
  %v376 = vmul.f32 %v206, %v374
  %v377 = vrcp.pop %v279
  %v378 = vmul.f32 %v207, %v377
  %v379 = vmul.f32 %v208, %v377
  %v380 = vrcp.pop %v284
  %v381 = vmul.f32 %v209, %v380
  %v382 = vmul.f32 %v210, %v380
  %v383 = vrcp.pop %v289
  %v384 = vmul.f32 %v211, %v383
  %v385 = vmul.f32 %v212, %v383
  %v386 = vrcp.pop %v294
  %v387 = vmul.f32 %v213, %v386
  %v388 = vmul.f32 %v214, %v386
  %v389 = vrcp.pop %v299
  %v390 = vmul.f32 %v215, %v389
  %v391 = vmul.f32 %v216, %v389
  %v392 = vrcp.pop %v304
  %v393 = vmul.f32 %v217, %v392
  %v394 = vmul.f32 %v218, %v392
  %v395 = vrcp.pop %v309
  %v396 = vmul.f32 %v219, %v395
  %v397 = vmul.f32 %v220, %v395
  %v398 = vrcp.pop %v314
  %v399 = vmul.f32 %v221, %v398
  %v400 = vmul.f32 %v222, %v398
  %v401 = vrcp.pop %v319
  %v402 = vmul.f32 %v223, %v401
  %v403 = vmul.f32 %v224, %v401
  %v404 = vrcp.pop %v324
  %v405 = vmul.f32 %v225, %v404
  %v406 = vmul.f32 %v226, %v404
  %v407 = vrcp.pop %v329
  %v408 = vmul.f32 %v227, %v407
  %v409 = vmul.f32 %v228, %v407
  %v410 = vrcp.pop %v334
  %v411 = vmul.f32 %v229, %v410
  %v412 = vmul.f32 %v230, %v410
  %v413 = vrcp.pop %v339
  %v414 = vmul.f32 %v231, %v413
  %v415 = vmul.f32 %v232, %v413
  %v416 = vrcp.pop %v344
  %v417 = vmul.f32 %v233, %v416
  %v418 = vmul.f32 %v234, %v416
  %v419 = vrcp.pop %v349
  %v420 = vmul.f32 %v235, %v419
  %v421 = vmul.f32 %v236, %v419
  %v422 = vrcp.pop %v354
  %v423 = vmul.f32 %v237, %v422
  %v424 = vmul.f32 %v238, %v422
  %v425 = vrcp.pop %v359
  %v426 = vmul.f32 %v239, %v425
  %v427 = vmul.f32 %v240, %v425
  %v428 = vrcp.pop %v364
  %v429 = vmul.f32 %v241, %v428
  %v430 = vmul.f32 %v242, %v428
  %v431 = vrcp.pop %v369
  %v432 = vmul.f32 %v243, %v431
  %v433 = vmul.f32 %v244, %v431
  %v434 = vmul.f32 %v372, 1.442695
  %v435 = vpow.pop %v434
  %v436 = vmul.f32 %v373, 1.442695
  %v437 = vpow.pop %v436
  %v438 = vmul.f32 %v375, 1.442695
  %v439 = vpow.pop %v438
  %v440 = vmul.f32 %v376, 1.442695
  %v441 = vpow.pop %v440
  %v442 = vmul.f32 %v378, 1.442695
  %v443 = vpow.pop %v442
  %v444 = vmul.f32 %v379, 1.442695
  %v445 = vpow.pop %v444
  %v446 = vmul.f32 %v381, 1.442695
  %v447 = vpow.pop %v446
  %v448 = vmul.f32 %v382, 1.442695
  %v449 = vpow.pop %v448
  %v450 = vmul.f32 %v384, 1.442695
  %v451 = vpow.pop %v450
  %v452 = vmul.f32 %v385, 1.442695
  %v453 = vpow.pop %v452
  %v454 = vmul.f32 %v387, 1.442695
  %v455 = vpow.pop %v454
  %v456 = vmul.f32 %v388, 1.442695
  %v457 = vpow.pop %v456
  %v458 = vmul.f32 %v390, 1.442695
  %v459 = vpow.pop %v458
  %v460 = vmul.f32 %v391, 1.442695
  %v461 = vpow.pop %v460
  %v462 = vmul.f32 %v393, 1.442695
  %v463 = vpow.pop %v462
  %v464 = vmul.f32 %v394, 1.442695
  %v465 = vpow.pop %v464
  %v466 = vmul.f32 %v396, 1.442695
  %v467 = vpow.pop %v466
  %v468 = vmul.f32 %v397, 1.442695
  %v469 = vpow.pop %v468
  %v470 = vmul.f32 %v399, 1.442695
  %v471 = vpow.pop %v470
  %v472 = vmul.f32 %v400, 1.442695
  %v473 = vpow.pop %v472
  %v474 = vmul.f32 %v402, 1.442695
  %v475 = vpow.pop %v474
  %v476 = vmul.f32 %v403, 1.442695
  %v477 = vpow.pop %v476
  %v478 = vmul.f32 %v405, 1.442695
  %v479 = vpow.pop %v478
  %v480 = vmul.f32 %v406, 1.442695
  %v481 = vpow.pop %v480
  %v482 = vmul.f32 %v408, 1.442695
  %v483 = vpow.pop %v482
  %v484 = vmul.f32 %v409, 1.442695
  %v485 = vpow.pop %v484
  %v486 = vmul.f32 %v411, 1.442695
  %v487 = vpow.pop %v486
  %v488 = vmul.f32 %v412, 1.442695
  %v489 = vpow.pop %v488
  %v490 = vmul.f32 %v414, 1.442695
  %v491 = vpow.pop %v490
  %v492 = vmul.f32 %v415, 1.442695
  %v493 = vpow.pop %v492
  %v494 = vmul.f32 %v417, 1.442695
  %v495 = vpow.pop %v494
  %v496 = vmul.f32 %v418, 1.442695
  %v497 = vpow.pop %v496
  %v498 = vmul.f32 %v420, 1.442695
  %v499 = vpow.pop %v498
  %v500 = vmul.f32 %v421, 1.442695
  %v501 = vpow.pop %v500
  %v502 = vmul.f32 %v423, 1.442695
  %v503 = vpow.pop %v502
  %v504 = vmul.f32 %v424, 1.442695
  %v505 = vpow.pop %v504
  %v506 = vmul.f32 %v426, 1.442695
  %v507 = vpow.pop %v506
  %v508 = vmul.f32 %v427, 1.442695
  %v509 = vpow.pop %v508
  %v510 = vmul.f32 %v429, 1.442695
  %v511 = vpow.pop %v510
  %v512 = vmul.f32 %v430, 1.442695
  %v513 = vpow.pop %v512
  %v514 = vmul.f32 %v432, 1.442695
  %v515 = vpow.pop %v514
  %v516 = vmul.f32 %v433, 1.442695
  %v517 = vpow.pop %v516
  %519 = vset.pattern.permute.xlu0 0
  %520 = vperm.xlu0 %519, %v140
  %v521 = vpop.permute.xlu0 %520
  %524 = vset.pattern.permute.xlu0 0
  %525 = vperm.xlu0 %524, %v141
  %v526 = vpop.permute.xlu0 %525
  %529 = vset.pattern.permute.xlu0 0
  %530 = vperm.xlu0 %529, %v142
  %v531 = vpop.permute.xlu0 %530
  %534 = vset.pattern.permute.xlu0 0
  %535 = vperm.xlu0 %534, %v143
  %v536 = vpop.permute.xlu0 %535
  %539 = vset.pattern.permute.xlu0 0
  %540 = vperm.xlu0 %539, %v144
  %v541 = vpop.permute.xlu0 %540
  %544 = vset.pattern.permute.xlu0 0
  %545 = vperm.xlu0 %544, %v145
  %v546 = vpop.permute.xlu0 %545
  %549 = vset.pattern.permute.xlu0 0
  %550 = vperm.xlu0 %549, %v146
  %v551 = vpop.permute.xlu0 %550
  %554 = vset.pattern.permute.xlu0 0
  %555 = vperm.xlu0 %554, %v147
  %v556 = vpop.permute.xlu0 %555
  %559 = vset.pattern.permute.xlu0 0
  %560 = vperm.xlu0 %559, %v148
  %v561 = vpop.permute.xlu0 %560
  %564 = vset.pattern.permute.xlu0 0
  %565 = vperm.xlu0 %564, %v149
  %v566 = vpop.permute.xlu0 %565
  %569 = vset.pattern.permute.xlu0 0
  %570 = vperm.xlu0 %569, %v150
  %v571 = vpop.permute.xlu0 %570
  %574 = vset.pattern.permute.xlu0 0
  %575 = vperm.xlu0 %574, %v151
  %v576 = vpop.permute.xlu0 %575
  %579 = vset.pattern.permute.xlu0 0
  %580 = vperm.xlu0 %579, %v152
  %v581 = vpop.permute.xlu0 %580
  %584 = vset.pattern.permute.xlu0 0
  %585 = vperm.xlu0 %584, %v153
  %v586 = vpop.permute.xlu0 %585
  %589 = vset.pattern.permute.xlu0 0
  %590 = vperm.xlu0 %589, %v154
  %v591 = vpop.permute.xlu0 %590
  %594 = vset.pattern.permute.xlu0 0
  %595 = vperm.xlu0 %594, %v155
  %v596 = vpop.permute.xlu0 %595
  %599 = vset.pattern.permute.xlu0 0
  %600 = vperm.xlu0 %599, %v156
  %v601 = vpop.permute.xlu0 %600
  %604 = vset.pattern.permute.xlu0 0
  %605 = vperm.xlu0 %604, %v157
  %v606 = vpop.permute.xlu0 %605
  %609 = vset.pattern.permute.xlu0 0
  %610 = vperm.xlu0 %609, %v158
  %v611 = vpop.permute.xlu0 %610
  %614 = vset.pattern.permute.xlu0 0
  %615 = vperm.xlu0 %614, %v159
  %v616 = vpop.permute.xlu0 %615
  %619 = vset.pattern.permute.xlu0 0
  %620 = vperm.xlu0 %619, %v160
  %v621 = vpop.permute.xlu0 %620
  %v623 = vmul.f32 %v521, %v435
  %v624 = vmul.f32 %v521, %v437
  %v625 = vmul.f32 %v526, %v439
  %v626 = vmul.f32 %v526, %v441
  %v627 = vmul.f32 %v531, %v443
  %v628 = vmul.f32 %v531, %v445
  %v629 = vmul.f32 %v536, %v447
  %v630 = vmul.f32 %v536, %v449
  %v631 = vmul.f32 %v541, %v451
  %v632 = vmul.f32 %v541, %v453
  %v633 = vmul.f32 %v546, %v455
  %v634 = vmul.f32 %v546, %v457
  %v635 = vmul.f32 %v551, %v459
  %v636 = vmul.f32 %v551, %v461
  %v637 = vmul.f32 %v556, %v463
  %v638 = vmul.f32 %v556, %v465
  %v639 = vmul.f32 %v561, %v467
  %v640 = vmul.f32 %v561, %v469
  %v641 = vmul.f32 %v566, %v471
  %v642 = vmul.f32 %v566, %v473
  %v643 = vmul.f32 %v571, %v475
  %v644 = vmul.f32 %v571, %v477
  %v645 = vmul.f32 %v576, %v479
  %v646 = vmul.f32 %v576, %v481
  %v647 = vmul.f32 %v581, %v483
  %v648 = vmul.f32 %v581, %v485
  %v649 = vmul.f32 %v586, %v487
  %v650 = vmul.f32 %v586, %v489
  %v651 = vmul.f32 %v591, %v491
  %v652 = vmul.f32 %v591, %v493
  %v653 = vmul.f32 %v596, %v495
  %v654 = vmul.f32 %v596, %v497
  %v655 = vmul.f32 %v601, %v499
  %v656 = vmul.f32 %v601, %v501
  %v657 = vmul.f32 %v606, %v503
  %v658 = vmul.f32 %v606, %v505
  %v659 = vmul.f32 %v611, %v507
  %v660 = vmul.f32 %v611, %v509
  %v661 = vmul.f32 %v616, %v511
  %v662 = vmul.f32 %v616, %v513
  %v663 = vmul.f32 %v621, %v515
  %v664 = vmul.f32 %v621, %v517
  %vm665 = vcmask 326656
  %v666 = vsel %vm665, %v624, 0.0
  %v667 = vadd.f32 %v623, %v666
  %668 = vadd.xlane.f32.xlu0 %v667
  %v669 = vpop.xlane.xlu0 %668
  %v670 = vsel %vm665, %v626, 0.0
  %v671 = vadd.f32 %v625, %v670
  %672 = vadd.xlane.f32.xlu0 %v671
  %v673 = vpop.xlane.xlu0 %672
  %v674 = vsel %vm665, %v628, 0.0
  %v675 = vadd.f32 %v627, %v674
  %676 = vadd.xlane.f32.xlu0 %v675
  %v677 = vpop.xlane.xlu0 %676
  %v678 = vsel %vm665, %v630, 0.0
  %v679 = vadd.f32 %v629, %v678
  %680 = vadd.xlane.f32.xlu0 %v679
  %v681 = vpop.xlane.xlu0 %680
  %v682 = vsel %vm665, %v632, 0.0
  %v683 = vadd.f32 %v631, %v682
  %684 = vadd.xlane.f32.xlu0 %v683
  %v685 = vpop.xlane.xlu0 %684
  %v686 = vsel %vm665, %v634, 0.0
  %v687 = vadd.f32 %v633, %v686
  %688 = vadd.xlane.f32.xlu0 %v687
  %v689 = vpop.xlane.xlu0 %688
  %v690 = vsel %vm665, %v636, 0.0
  %v691 = vadd.f32 %v635, %v690
  %692 = vadd.xlane.f32.xlu0 %v691
  %v693 = vpop.xlane.xlu0 %692
  %v694 = vsel %vm665, %v638, 0.0
  %v695 = vadd.f32 %v637, %v694
  %696 = vadd.xlane.f32.xlu0 %v695
  %v697 = vpop.xlane.xlu0 %696
  %v698 = vsel %vm665, %v640, 0.0
  %v699 = vadd.f32 %v639, %v698
  %700 = vadd.xlane.f32.xlu0 %v699
  %v701 = vpop.xlane.xlu0 %700
  %v702 = vsel %vm665, %v642, 0.0
  %v703 = vadd.f32 %v641, %v702
  %704 = vadd.xlane.f32.xlu0 %v703
  %v705 = vpop.xlane.xlu0 %704
  %v706 = vsel %vm665, %v644, 0.0
  %v707 = vadd.f32 %v643, %v706
  %708 = vadd.xlane.f32.xlu0 %v707
  %v709 = vpop.xlane.xlu0 %708
  %v710 = vsel %vm665, %v646, 0.0
  %v711 = vadd.f32 %v645, %v710
  %712 = vadd.xlane.f32.xlu0 %v711
  %v713 = vpop.xlane.xlu0 %712
  %v714 = vsel %vm665, %v648, 0.0
  %v715 = vadd.f32 %v647, %v714
  %716 = vadd.xlane.f32.xlu0 %v715
  %v717 = vpop.xlane.xlu0 %716
  %v718 = vsel %vm665, %v650, 0.0
  %v719 = vadd.f32 %v649, %v718
  %720 = vadd.xlane.f32.xlu0 %v719
  %v721 = vpop.xlane.xlu0 %720
  %v722 = vsel %vm665, %v652, 0.0
  %v723 = vadd.f32 %v651, %v722
  %724 = vadd.xlane.f32.xlu0 %v723
  %v725 = vpop.xlane.xlu0 %724
  %v726 = vsel %vm665, %v654, 0.0
  %v727 = vadd.f32 %v653, %v726
  %728 = vadd.xlane.f32.xlu0 %v727
  %v729 = vpop.xlane.xlu0 %728
  %v730 = vsel %vm665, %v656, 0.0
  %v731 = vadd.f32 %v655, %v730
  %732 = vadd.xlane.f32.xlu0 %v731
  %v733 = vpop.xlane.xlu0 %732
  %v734 = vsel %vm665, %v658, 0.0
  %v735 = vadd.f32 %v657, %v734
  %736 = vadd.xlane.f32.xlu0 %v735
  %v737 = vpop.xlane.xlu0 %736
  %v738 = vsel %vm665, %v660, 0.0
  %v739 = vadd.f32 %v659, %v738
  %740 = vadd.xlane.f32.xlu0 %v739
  %v741 = vpop.xlane.xlu0 %740
  %v742 = vsel %vm665, %v662, 0.0
  %v743 = vadd.f32 %v661, %v742
  %744 = vadd.xlane.f32.xlu0 %v743
  %v745 = vpop.xlane.xlu0 %744
  %v746 = vsel %vm665, %v664, 0.0
  %v747 = vadd.f32 %v663, %v746
  %748 = vadd.xlane.f32.xlu0 %v747
  %v749 = vpop.xlane.xlu0 %748
  %v750 = vld [vmem:[%s2] sm:$0xff]
  %v751 = vld [vmem:[%s2 + $0x8] sm:$0xff]
  %v752 = vld [vmem:[%s2 + $0x10] sm:$0xff]
  %v753 = vld [vmem:[%s2 + $0x18] sm:$0xff]
  %v754 = vld [vmem:[%s2 + $0x20] sm:$0xff]
  %v755 = vld [vmem:[%s2 + $0x28] sm:$0xff]
  %v756 = vld [vmem:[%s2 + $0x30] sm:$0xff]
  %v757 = vld [vmem:[%s2 + $0x38] sm:$0xff]
  %v758 = vld [vmem:[%s2 + $0x40] sm:$0xff]
  %v759 = vld [vmem:[%s2 + $0x48] sm:$0xff]
  %v760 = vld [vmem:[%s2 + $0x50] sm:$0xff]
  %v761 = vld [vmem:[%s2 + $0x58] sm:$0xff]
  %v762 = vld [vmem:[%s2 + $0x60] sm:$0xff]
  %v763 = vld [vmem:[%s2 + $0x68] sm:$0xff]
  %v764 = vld [vmem:[%s2 + $0x70] sm:$0xff]
  %v765 = vld [vmem:[%s2 + $0x78] sm:$0xff]
  %v766 = vld [vmem:[%s2 + $0x80] sm:$0xff]
  %v767 = vld [vmem:[%s2 + $0x88] sm:$0xff]
  %v768 = vld [vmem:[%s2 + $0x90] sm:$0xff]
  %v769 = vld [vmem:[%s2 + $0x98] sm:$0xff]
  %v770 = vld [vmem:[%s2 + $0xa0] sm:$0xff]
  %v772 = vsel %vm665, %v624, 0
  %v775 = vsel %vm665, %v626, 0
  %v778 = vsel %vm665, %v628, 0
  %v781 = vsel %vm665, %v630, 0
  %v784 = vsel %vm665, %v632, 0
  %v787 = vsel %vm665, %v634, 0
  %v790 = vsel %vm665, %v636, 0
  %v793 = vsel %vm665, %v638, 0
  %v796 = vsel %vm665, %v640, 0
  %v799 = vsel %vm665, %v642, 0
  %v802 = vsel %vm665, %v644, 0
  %v805 = vsel %vm665, %v646, 0
  %v808 = vsel %vm665, %v648, 0
  %v811 = vsel %vm665, %v650, 0
  %v814 = vsel %vm665, %v652, 0
  %v817 = vsel %vm665, %v654, 0
  %v820 = vsel %vm665, %v656, 0
  %v823 = vsel %vm665, %v658, 0
  %v826 = vsel %vm665, %v660, 0
  %v829 = vsel %vm665, %v662, 0
  %v832 = vsel %vm665, %v664, 0
  %834 = vmatprep.subr.mxu0 0.0
  %835 = vmatpush1.msra.mxu0 %v765
  %836 = vmatprep.subr.mxu0 0.0
  %837 = vmatpush1.msra.mxu0 %v764
  %838 = vmatprep.subr.mxu0 0.0
  %839 = vmatpush1.msra.mxu0 %v763
  %840 = vmatprep.subr.mxu0 0.0
  %841 = vmatpush1.msra.mxu0 %v762
  %842 = vmatprep.subr.mxu0 0.0
  %843 = vmatpush1.msra.mxu0 %v761
  %844 = vmatprep.subr.mxu0 0.0
  %845 = vmatpush1.msra.mxu0 %v760
  %846 = vmatprep.subr.mxu0 0.0
  %847 = vmatpush1.msra.mxu0 %v759
  %848 = vmatprep.subr.mxu0 0.0
  %849 = vmatpush1.msra.mxu0 %v758
  %850 = vmatprep.subr.mxu0 0.0
  %851 = vmatpush1.msra.mxu0 %v757
  %852 = vmatprep.subr.mxu0 0.0
  %853 = vmatpush1.msra.mxu0 %v756
  %854 = vmatprep.subr.mxu0 0.0
  %855 = vmatpush1.msra.mxu0 %v755
  %856 = vmatprep.subr.mxu0 0.0
  %857 = vmatpush1.msra.mxu0 %v754
  %858 = vmatprep.subr.mxu0 0.0
  %859 = vmatpush1.msra.mxu0 %v753
  %860 = vmatprep.subr.mxu0 0.0
  %861 = vmatpush1.msra.mxu0 %v752
  %862 = vmatprep.subr.mxu0 0.0
  %863 = vmatpush1.msra.mxu0 %v751
  %864 = vmatprep.subr.mxu0 0.0
  %865 = vmatpush1.msra.mxu0 %v750
  %866 = vmatprep.subr.mxu0 0.0
  %867 = vmatpush2.msra.mxu0 0.0
  %868 = vmatprep.subr.mxu0 0.0
  %869 = vmatpush2.msra.mxu0 0.0
  %870 = vmatprep.subr.mxu0 0.0
  %871 = vmatpush2.msra.mxu0 0.0
  %872 = vmatprep.subr.mxu0 0.0
  %873 = vmatpush2.msra.mxu0 0.0
  %874 = vmatprep.subr.mxu0 0.0
  %875 = vmatpush2.msra.mxu0 0.0
  %876 = vmatprep.subr.mxu0 0.0
  %877 = vmatpush2.msra.mxu0 0.0
  %878 = vmatprep.subr.mxu0 0.0
  %879 = vmatpush2.msra.mxu0 0.0
  %880 = vmatprep.subr.mxu0 0.0
  %881 = vmatpush2.msra.mxu0 0.0
  %882 = vmatprep.subr.mxu0 0.0
  %883 = vmatpush2.msra.mxu0 0.0
  %884 = vmatprep.subr.mxu0 0.0
  %885 = vmatpush2.msra.mxu0 0.0
  %886 = vmatprep.subr.mxu0 0.0
  %887 = vmatpush2.msra.mxu0 0.0
  %888 = vmatprep.subr.mxu0 0.0
  %889 = vmatpush2.msra.mxu0 %v770
  %890 = vmatprep.subr.mxu0 0.0
  %891 = vmatpush2.msra.mxu0 %v769
  %892 = vmatprep.subr.mxu0 0.0
  %893 = vmatpush2.msra.mxu0 %v768
  %894 = vmatprep.subr.mxu0 0.0
  %895 = vmatpush2.msra.mxu0 %v767
  %896 = vmatprep.subr.mxu0 0.0
  %897 = vmatpush2.msra.mxu0 %v766
  %898 = vmatprep.mubr.f32.mxu0 %v772
  %899 = vmatmul.mubr.f32.gmra.mxu0 %v623
  %v900 = vpop.f32.mrf.mxu0
  %v901 = vadd.f32 0.0, %v900
  %v902 = vpop.f32.mrf.mxu0
  %903 = vmatprep.mubr.f32.mxu0 %v775
  %904 = vmatmul.mubr.f32.gmra.mxu0 %v625
  %v905 = vpop.f32.mrf.mxu0
  %v906 = vadd.f32 0.0, %v905
  %v907 = vpop.f32.mrf.mxu0
  %908 = vmatprep.mubr.f32.mxu0 %v778
  %909 = vmatmul.mubr.f32.gmra.mxu0 %v627
  %v910 = vpop.f32.mrf.mxu0
  %v911 = vadd.f32 0.0, %v910
  %v912 = vpop.f32.mrf.mxu0
  %913 = vmatprep.mubr.f32.mxu0 %v781
  %914 = vmatmul.mubr.f32.gmra.mxu0 %v629
  %v915 = vpop.f32.mrf.mxu0
  %v916 = vadd.f32 0.0, %v915
  %v917 = vpop.f32.mrf.mxu0
  %918 = vmatprep.mubr.f32.mxu0 %v784
  %919 = vmatmul.mubr.f32.gmra.mxu0 %v631
  %v920 = vpop.f32.mrf.mxu0
  %v921 = vadd.f32 0.0, %v920
  %v922 = vpop.f32.mrf.mxu0
  %923 = vmatprep.mubr.f32.mxu0 %v787
  %924 = vmatmul.mubr.f32.gmra.mxu0 %v633
  %v925 = vpop.f32.mrf.mxu0
  %v926 = vadd.f32 0.0, %v925
  %v927 = vpop.f32.mrf.mxu0
  %928 = vmatprep.mubr.f32.mxu0 %v790
  %929 = vmatmul.mubr.f32.gmra.mxu0 %v635
  %v930 = vpop.f32.mrf.mxu0
  %v931 = vadd.f32 0.0, %v930
  %v932 = vpop.f32.mrf.mxu0
  %933 = vmatprep.mubr.f32.mxu0 %v793
  %934 = vmatmul.mubr.f32.gmra.mxu0 %v637
  %v935 = vpop.f32.mrf.mxu0
  %v936 = vadd.f32 0.0, %v935
  %v937 = vpop.f32.mrf.mxu0
  %938 = vmatprep.mubr.f32.mxu0 %v796
  %939 = vmatmul.mubr.f32.gmra.mxu0 %v639
  %v940 = vpop.f32.mrf.mxu0
  %v941 = vadd.f32 0.0, %v940
  %v942 = vpop.f32.mrf.mxu0
  %943 = vmatprep.mubr.f32.mxu0 %v799
  %944 = vmatmul.mubr.f32.gmra.mxu0 %v641
  %v945 = vpop.f32.mrf.mxu0
  %v946 = vadd.f32 0.0, %v945
  %v947 = vpop.f32.mrf.mxu0
  %948 = vmatprep.mubr.f32.mxu0 %v802
  %949 = vmatmul.mubr.f32.gmra.mxu0 %v643
  %v950 = vpop.f32.mrf.mxu0
  %v951 = vadd.f32 0.0, %v950
  %v952 = vpop.f32.mrf.mxu0
  %953 = vmatprep.mubr.f32.mxu0 %v805
  %954 = vmatmul.mubr.f32.gmra.mxu0 %v645
  %v955 = vpop.f32.mrf.mxu0
  %v956 = vadd.f32 0.0, %v955
  %v957 = vpop.f32.mrf.mxu0
  %958 = vmatprep.mubr.f32.mxu0 %v808
  %959 = vmatmul.mubr.f32.gmra.mxu0 %v647
  %v960 = vpop.f32.mrf.mxu0
  %v961 = vadd.f32 0.0, %v960
  %v962 = vpop.f32.mrf.mxu0
  %963 = vmatprep.mubr.f32.mxu0 %v811
  %964 = vmatmul.mubr.f32.gmra.mxu0 %v649
  %v965 = vpop.f32.mrf.mxu0
  %v966 = vadd.f32 0.0, %v965
  %v967 = vpop.f32.mrf.mxu0
  %968 = vmatprep.mubr.f32.mxu0 %v814
  %969 = vmatmul.mubr.f32.gmra.mxu0 %v651
  %v970 = vpop.f32.mrf.mxu0
  %v971 = vadd.f32 0.0, %v970
  %v972 = vpop.f32.mrf.mxu0
  %973 = vmatprep.mubr.f32.mxu0 %v817
  %974 = vmatmul.mubr.f32.gmra.mxu0 %v653
  %v975 = vpop.f32.mrf.mxu0
  %v976 = vadd.f32 0.0, %v975
  %v977 = vpop.f32.mrf.mxu0
  %978 = vmatprep.mubr.f32.mxu0 %v820
  %979 = vmatmul.mubr.f32.gmra.mxu0 %v655
  %v980 = vpop.f32.mrf.mxu0
  %v981 = vadd.f32 0.0, %v980
  %v982 = vpop.f32.mrf.mxu0
  %983 = vmatprep.mubr.f32.mxu0 %v823
  %984 = vmatmul.mubr.f32.gmra.mxu0 %v657
  %v985 = vpop.f32.mrf.mxu0
  %v986 = vadd.f32 0.0, %v985
  %v987 = vpop.f32.mrf.mxu0
  %988 = vmatprep.mubr.f32.mxu0 %v826
  %989 = vmatmul.mubr.f32.gmra.mxu0 %v659
  %v990 = vpop.f32.mrf.mxu0
  %v991 = vadd.f32 0.0, %v990
  %v992 = vpop.f32.mrf.mxu0
  %993 = vmatprep.mubr.f32.mxu0 %v829
  %994 = vmatmul.mubr.f32.gmra.mxu0 %v661
  %v995 = vpop.f32.mrf.mxu0
  %v996 = vadd.f32 0.0, %v995
  %v997 = vpop.f32.mrf.mxu0
  %998 = vmatprep.mubr.f32.mxu0 %v832
  %999 = vmatmul.mubr.f32.gmra.mxu0 %v663
  %v1000 = vpop.f32.mrf.mxu0
  %v1001 = vadd.f32 0.0, %v1000
  %v1002 = vpop.f32.mrf.mxu0
  %1003 = vdwg.mxu0
  %v1004 = vrcp.pop %v669
  %v1005 = vrcp.pop %v673
  %v1006 = vrcp.pop %v677
  %v1007 = vrcp.pop %v681
  %v1008 = vrcp.pop %v685
  %v1009 = vrcp.pop %v689
  %v1010 = vrcp.pop %v693
  %v1011 = vrcp.pop %v697
  %v1012 = vrcp.pop %v701
  %v1013 = vrcp.pop %v705
  %v1014 = vrcp.pop %v709
  %v1015 = vrcp.pop %v713
  %v1016 = vrcp.pop %v717
  %v1017 = vrcp.pop %v721
  %v1018 = vrcp.pop %v725
  %v1019 = vrcp.pop %v729
  %v1020 = vrcp.pop %v733
  %v1021 = vrcp.pop %v737
  %v1022 = vrcp.pop %v741
  %v1023 = vrcp.pop %v745
  %v1024 = vrcp.pop %v749
  %v1025 = vmul.f32 %v901, %v1004
  %v1026 = vmul.f32 %v906, %v1005
  %v1027 = vmul.f32 %v911, %v1006
  %v1028 = vmul.f32 %v916, %v1007
  %v1029 = vmul.f32 %v921, %v1008
  %v1030 = vmul.f32 %v926, %v1009
  %v1031 = vmul.f32 %v931, %v1010
  %v1032 = vmul.f32 %v936, %v1011
  %v1033 = vmul.f32 %v941, %v1012
  %v1034 = vmul.f32 %v946, %v1013
  %v1035 = vmul.f32 %v951, %v1014
  %v1036 = vmul.f32 %v956, %v1015
  %v1037 = vmul.f32 %v961, %v1016
  %v1038 = vmul.f32 %v966, %v1017
  %v1039 = vmul.f32 %v971, %v1018
  %v1040 = vmul.f32 %v976, %v1019
  %v1041 = vmul.f32 %v981, %v1020
  %v1042 = vmul.f32 %v986, %v1021
  %v1043 = vmul.f32 %v991, %v1022
  %v1044 = vmul.f32 %v996, %v1023
  %v1045 = vmul.f32 %v1001, %v1024
  %vm1046 = vcmask 130048
  %1047 = vst.msk [vmem:[%s3] sm:$0xff] %vm1046, %v1025
  %1048 = vst.msk [vmem:[%s3 + $0x8] sm:$0xff] %vm1046, %v1026
  %1049 = vst.msk [vmem:[%s3 + $0x10] sm:$0xff] %vm1046, %v1027
  %1050 = vst.msk [vmem:[%s3 + $0x18] sm:$0xff] %vm1046, %v1028
  %1051 = vst.msk [vmem:[%s3 + $0x20] sm:$0xff] %vm1046, %v1029
  %1052 = vst.msk [vmem:[%s3 + $0x28] sm:$0xff] %vm1046, %v1030
  %1053 = vst.msk [vmem:[%s3 + $0x30] sm:$0xff] %vm1046, %v1031
  %1054 = vst.msk [vmem:[%s3 + $0x38] sm:$0xff] %vm1046, %v1032
  %1055 = vst.msk [vmem:[%s3 + $0x40] sm:$0xff] %vm1046, %v1033
  %1056 = vst.msk [vmem:[%s3 + $0x48] sm:$0xff] %vm1046, %v1034
  %1057 = vst.msk [vmem:[%s3 + $0x50] sm:$0xff] %vm1046, %v1035
  %1058 = vst.msk [vmem:[%s3 + $0x58] sm:$0xff] %vm1046, %v1036
  %1059 = vst.msk [vmem:[%s3 + $0x60] sm:$0xff] %vm1046, %v1037
  %1060 = vst.msk [vmem:[%s3 + $0x68] sm:$0xff] %vm1046, %v1038
  %1061 = vst.msk [vmem:[%s3 + $0x70] sm:$0xff] %vm1046, %v1039
  %1062 = vst.msk [vmem:[%s3 + $0x78] sm:$0xff] %vm1046, %v1040
  %1063 = vst.msk [vmem:[%s3 + $0x80] sm:$0xff] %vm1046, %v1041
  %1064 = vst.msk [vmem:[%s3 + $0x88] sm:$0xff] %vm1046, %v1042
  %1065 = vst.msk [vmem:[%s3 + $0x90] sm:$0xff] %vm1046, %v1043
  %1066 = vst.msk [vmem:[%s3 + $0x98] sm:$0xff] %vm1046, %v1044
  %1067 = vst.msk [vmem:[%s3 + $0xa0] sm:$0xff] %vm1046, %v1045
  // Predicated region
  $region14: #{tpu_custom_call.1} parent=0 // pred_check
    _
  $region15: #{tpu_custom_call.1} parent=0 // pred_check_branch
    %1069 = sbr.rel (0) target = $region17
  $region16: #{tpu_custom_call.1} parent=0 // pred_region
    _
  $region17: #{tpu_custom_call.1} parent=0 // pred_fallthru
    _
  // Predicated region
  $region18: #{tpu_custom_call.1} parent=0 // pred_check
    _
  $region19: #{tpu_custom_call.1} parent=0 // pred_check_branch
    %1071 = sbr.rel (0) target = $region21
  $region20: #{tpu_custom_call.1} parent=0 // pred_region
    _
  $region21: #{tpu_custom_call.1} parent=0 // pred_fallthru
    _

</llo_original>
